<compile_context>
chip_gen: v7x
topology: tpu7x:2x2x1
jax: 0.10.0
libtpu: 0.0.40
codegen_flags: <defaults>
</compile_context>

<pallas_src>
import jax
import jax.numpy as jnp
from jax import lax
from jax.experimental import pallas as pl
from jax.experimental.pallas import tpu as pltpu

VOCAB = 128     # vocab_size  (multiple of 128 -> lane-dense logits / log_probs)
EMBED = 16      # embedding_dim
CONTEXT = 2     # context_size
HIDDEN = 128    # fixed by the module: nn.Linear(context_size * embedding_dim, 128)
BM = 8          # batch tile (context windows per grid step); multiple of 8 sublanes.
                # For production throughput raise to 128 (v5e) / 256 (v6e/v7x).


def _ngram_kernel(idx_ref, emb_ref, w1_ref, b1_ref, w2_ref, b2_ref, o_ref, x_ref):
    """Fused gather -> linear1 -> ReLU -> linear2 -> log_softmax for BM windows.

    idx_ref : (B_pad*C,)   int32 SMEM (scalar prefetch, flattened token ids)
    emb_ref : (V, D)       f32   VMEM  (embedding table)
    w1_ref  : (C, D, H)    f32   VMEM  (linear1 weight, lane-dense per position)
    b1_ref  : (1, H)       f32   VMEM
    w2_ref  : (H, V)       f32   VMEM  (linear2 weight, pre-transposed, lane-dense)
    b2_ref  : (1, V)       f32   VMEM
    o_ref   : (BM, V)      f32   VMEM  (log_probs tile)
    x_ref   : (BM, D)      f32   VMEM scratch (gathered embeddings for one position)
    """
    bm = o_ref.shape[0]
    ctx = w1_ref.shape[0]
    base = pl.program_id(0) * bm

    # linear1(embeds.view(-1)) == b1 + sum_j E[idx[:, j]] @ W1_j,  W1_j: (D, H)
    acc = b1_ref[...]                               # (1, H) broadcasts to (bm, H)
    for j in range(ctx):                            # tiny static trip counts -> unroll
        for b in range(bm):
            tok = idx_ref[(base + b) * ctx + j]     # SMEM scalar read
            x_ref[pl.ds(b, 1), :] = emb_ref[pl.ds(tok, 1), :]   # (1, D) row gather
        acc = acc + jnp.dot(x_ref[...], w1_ref[j],
                            preferred_element_type=jnp.float32)
    h = jnp.maximum(acc, 0.0)                       # ReLU, (bm, H)

    # linear2: (bm, H) @ (H, V) -> (bm, V), both operands lane-dense.
    logits = jnp.dot(h, w2_ref[...],
                     preferred_element_type=jnp.float32) + b2_ref[...]

    # log_softmax along the lane (vocab) axis.
    m = jnp.max(logits, axis=-1, keepdims=True)
    z = logits - m
    lse = jnp.log(jnp.sum(jnp.exp(z), axis=-1, keepdims=True))
    o_ref[...] = z - lse


def ngram_forward_batched(inputs, emb, w1, b1, w2, b2):
    """inputs: (B, C) int token ids -> (B, V) log-probs, one context window per row."""
    V, D = emb.shape
    H, in_dim = w1.shape
    C = in_dim // D
    assert (V, D, H, C) == (VOCAB, EMBED, HIDDEN, CONTEXT)

    B = inputs.shape[0]
    b_pad = pl.cdiv(B, BM) * BM

    # Bounds-safe gather: clamp ids; pad batch to a whole number of BM tiles.
    idx = jnp.clip(inputs.astype(jnp.int32), 0, V - 1)
    if b_pad != B:
        idx = jnp.concatenate([idx, jnp.zeros((b_pad - B, C), jnp.int32)], axis=0)
    idx_flat = idx.reshape(-1)

    # One-time XLA layout plumbing (lane-dense MXU operands):
    w1r = jnp.transpose(w1.reshape(H, C, D), (1, 2, 0))   # (C, D, H) = (2, 16, 128)
    w2t = jnp.transpose(w2)                                # (H, V)   = (128, 128)
    b1_2d = b1.reshape(1, H)
    b2_2d = b2.reshape(1, V)

    flops = 2 * b_pad * (C * D * H + H * V)
    bytes_accessed = 4 * (V * D + C * D * H + H + H * V + V + b_pad * V + b_pad * C)
    cost = pl.CostEstimate(flops=flops, transcendentals=b_pad * (V + 1),
                           bytes_accessed=bytes_accessed)

    out = pl.pallas_call(
        _ngram_kernel,
        out_shape=jax.ShapeDtypeStruct((b_pad, V), jnp.float32),
        grid_spec=pltpu.PrefetchScalarGridSpec(
            num_scalar_prefetch=1,              # token ids -> SMEM before the grid runs
            grid=(b_pad // BM,),
            in_specs=[
                # Weights: full-extent blocks, constant block index -> VMEM-resident
                # across grid steps (no re-DMA per batch tile).
                pl.BlockSpec((V, D), lambda i, idx: (0, 0)),
                pl.BlockSpec((C, D, H), lambda i, idx: (0, 0, 0)),
                pl.BlockSpec((1, H), lambda i, idx: (0, 0)),
                pl.BlockSpec((H, V), lambda i, idx: (0, 0)),
                pl.BlockSpec((1, V), lambda i, idx: (0, 0)),
            ],
            out_specs=pl.BlockSpec((BM, V), lambda i, idx: (i, 0)),
            scratch_shapes=[pltpu.VMEM((BM, D), jnp.float32)],
        ),
        compiler_params=pltpu.CompilerParams(
            dimension_semantics=("parallel",)),   # shards batch tiles across v7x TCs
        cost_estimate=cost,
    )(idx_flat, emb, w1r, b1_2d, w2t, b2_2d)
    return out[:B]


def ngram_forward(inputs, emb, w1, b1, w2, b2):
    """Matches NGramLanguageModeler.forward: inputs (C,) token ids -> (1, V) log-probs."""
    return ngram_forward_batched(inputs.reshape(1, -1), emb, w1, b1, w2, b2)


def reference_forward(inputs, emb, w1, b1, w2, b2):
    """Pure-JAX reference mirroring the PyTorch forward exactly (single window)."""
    embeds = emb[inputs].reshape(1, -1)
    out = jnp.maximum(embeds @ w1.T + b1[None, :], 0.0)
    out = out @ w2.T + b2[None, :]
    return jax.nn.log_softmax(out, axis=1)


if __name__ == "__main__":
    key = jax.random.PRNGKey(0)
    k_emb, k_w1, k_b1, k_w2, k_b2, k_idx, k_bat = jax.random.split(key, 7)

    # nn.Embedding(..., sparse=True): `sparse` only affects the gradient representation;
    # the forward gather is identical.
    emb = jax.random.normal(k_emb, (VOCAB, EMBED), dtype=jnp.float32) * 0.1
    w1 = jax.random.normal(k_w1, (HIDDEN, CONTEXT * EMBED), dtype=jnp.float32) * 0.1
    b1 = jax.random.normal(k_b1, (HIDDEN,), dtype=jnp.float32) * 0.1
    w2 = jax.random.normal(k_w2, (VOCAB, HIDDEN), dtype=jnp.float32) * 0.1
    b2 = jax.random.normal(k_b2, (VOCAB,), dtype=jnp.float32) * 0.1

    # 1) Module-exact single-window forward.
    inputs = jax.random.randint(k_idx, (CONTEXT,), 0, VOCAB, dtype=jnp.int32)
    out = jax.block_until_ready(ngram_forward(inputs, emb, w1, b1, w2, b2))
    ref = reference_forward(inputs, emb, w1, b1, w2, b2)
    assert out.shape == (1, VOCAB)
    assert jnp.allclose(out, ref, rtol=1e-5, atol=1e-5), "single-window mismatch"

    # 2) Batched path (multiple context windows per pallas_call).
    batch_inputs = jax.random.randint(k_bat, (5, CONTEXT), 0, VOCAB, dtype=jnp.int32)
    bout = jax.block_until_ready(
        ngram_forward_batched(batch_inputs, emb, w1, b1, w2, b2))
    bref = jnp.concatenate(
        [reference_forward(batch_inputs[i], emb, w1, b1, w2, b2)
         for i in range(batch_inputs.shape[0])], axis=0)
    assert bout.shape == (5, VOCAB)
    assert jnp.allclose(bout, bref, rtol=1e-5, atol=1e-5), "batched mismatch"

    print("KERNEL_OK")
</pallas_src>

<mosaic_0001>
module attributes {stable_mosaic.version = 11 : i64} {
  func.func @_ngram_kernel(%arg0: i32, %arg1: memref<16xi32, #tpu.memory_space<smem>>, %arg2: memref<128x16xf32, #tpu.memory_space<vmem>>, %arg3: memref<2x16x128xf32, #tpu.memory_space<vmem>>, %arg4: memref<1x128xf32, #tpu.memory_space<vmem>>, %arg5: memref<128x128xf32, #tpu.memory_space<vmem>>, %arg6: memref<1x128xf32, #tpu.memory_space<vmem>>, %arg7: memref<8x128xf32, #tpu.memory_space<vmem>>, %arg8: memref<8x16xf32, #tpu.memory_space<vmem>>) attributes {dimension_semantics = [#tpu.dimension_semantics<parallel>], iteration_bounds = array<i64: 1>, scalar_prefetch = 1 : i64, scratch_operands = 1 : i64, tpu.core_type = #tpu.core_type<tc>, window_params = [{pipeline_mode = #tpu.pipeline_mode<synchronous>, transform_indices = @transform_0, window_bounds = array<i64: 128, 16>}, {pipeline_mode = #tpu.pipeline_mode<synchronous>, transform_indices = @transform_1, window_bounds = array<i64: 2, 16, 128>}, {pipeline_mode = #tpu.pipeline_mode<synchronous>, transform_indices = @transform_2, window_bounds = array<i64: 1, 128>}, {pipeline_mode = #tpu.pipeline_mode<synchronous>, transform_indices = @transform_3, window_bounds = array<i64: 128, 128>}, {pipeline_mode = #tpu.pipeline_mode<synchronous>, transform_indices = @transform_4, window_bounds = array<i64: 1, 128>}, {transform_indices = @transform_5, window_bounds = array<i64: 8, 128>}]} {
    %c8_i32 = arith.constant 8 : i32
    %0 = arith.muli %arg0, %c8_i32 : i32
    %c0 = arith.constant 0 : index
    %c0_0 = arith.constant 0 : index
    %1 = vector.load %arg4[%c0, %c0_0] : memref<1x128xf32, #tpu.memory_space<vmem>>, vector<1x128xf32>
    %c0_i32 = arith.constant 0 : i32
    %2 = arith.addi %0, %c0_i32 : i32
    %c2_i32 = arith.constant 2 : i32
    %3 = arith.muli %2, %c2_i32 : i32
    %c0_i32_1 = arith.constant 0 : i32
    %4 = arith.addi %3, %c0_i32_1 : i32
    %5 = arith.index_cast %4 : i32 to index
    %6 = memref.load %arg1[%5] : memref<16xi32, #tpu.memory_space<smem>>
    %7 = arith.index_cast %6 : i32 to index
    %c0_2 = arith.constant 0 : index
    %8 = vector.load %arg2[%7, %c0_2] : memref<128x16xf32, #tpu.memory_space<vmem>>, vector<1x16xf32>
    %c0_3 = arith.constant 0 : index
    %c0_4 = arith.constant 0 : index
    %9 = vector.load %arg8[%c0_3, %c0_4] : memref<8x16xf32, #tpu.memory_space<vmem>>, vector<1x16xf32>
    tpu.vector_store %arg8[%c0_3, %c0_4], %8 {strides = array<i32>} : memref<8x16xf32, #tpu.memory_space<vmem>>, vector<1x16xf32>,
    %c1_i32 = arith.constant 1 : i32
    %10 = arith.addi %0, %c1_i32 : i32
    %c2_i32_5 = arith.constant 2 : i32
    %11 = arith.muli %10, %c2_i32_5 : i32
    %c0_i32_6 = arith.constant 0 : i32
    %12 = arith.addi %11, %c0_i32_6 : i32
    %13 = arith.index_cast %12 : i32 to index
    %14 = memref.load %arg1[%13] : memref<16xi32, #tpu.memory_space<smem>>
    %15 = arith.index_cast %14 : i32 to index
    %c0_7 = arith.constant 0 : index
    %16 = vector.load %arg2[%15, %c0_7] : memref<128x16xf32, #tpu.memory_space<vmem>>, vector<1x16xf32>
    %c1 = arith.constant 1 : index
    %c0_8 = arith.constant 0 : index
    %17 = vector.load %arg8[%c1, %c0_8] : memref<8x16xf32, #tpu.memory_space<vmem>>, vector<1x16xf32>
    tpu.vector_store %arg8[%c1, %c0_8], %16 {strides = array<i32>} : memref<8x16xf32, #tpu.memory_space<vmem>>, vector<1x16xf32>,
    %c2_i32_9 = arith.constant 2 : i32
    %18 = arith.addi %0, %c2_i32_9 : i32
    %c2_i32_10 = arith.constant 2 : i32
    %19 = arith.muli %18, %c2_i32_10 : i32
    %c0_i32_11 = arith.constant 0 : i32
    %20 = arith.addi %19, %c0_i32_11 : i32
    %21 = arith.index_cast %20 : i32 to index
    %22 = memref.load %arg1[%21] : memref<16xi32, #tpu.memory_space<smem>>
    %23 = arith.index_cast %22 : i32 to index
    %c0_12 = arith.constant 0 : index
    %24 = vector.load %arg2[%23, %c0_12] : memref<128x16xf32, #tpu.memory_space<vmem>>, vector<1x16xf32>
    %c2 = arith.constant 2 : index
    %c0_13 = arith.constant 0 : index
    %25 = vector.load %arg8[%c2, %c0_13] : memref<8x16xf32, #tpu.memory_space<vmem>>, vector<1x16xf32>
    tpu.vector_store %arg8[%c2, %c0_13], %24 {strides = array<i32>} : memref<8x16xf32, #tpu.memory_space<vmem>>, vector<1x16xf32>,
    %c3_i32 = arith.constant 3 : i32
    %26 = arith.addi %0, %c3_i32 : i32
    %c2_i32_14 = arith.constant 2 : i32
    %27 = arith.muli %26, %c2_i32_14 : i32
    %c0_i32_15 = arith.constant 0 : i32
    %28 = arith.addi %27, %c0_i32_15 : i32
    %29 = arith.index_cast %28 : i32 to index
    %30 = memref.load %arg1[%29] : memref<16xi32, #tpu.memory_space<smem>>
    %31 = arith.index_cast %30 : i32 to index
    %c0_16 = arith.constant 0 : index
    %32 = vector.load %arg2[%31, %c0_16] : memref<128x16xf32, #tpu.memory_space<vmem>>, vector<1x16xf32>
    %c3 = arith.constant 3 : index
    %c0_17 = arith.constant 0 : index
    %33 = vector.load %arg8[%c3, %c0_17] : memref<8x16xf32, #tpu.memory_space<vmem>>, vector<1x16xf32>
    tpu.vector_store %arg8[%c3, %c0_17], %32 {strides = array<i32>} : memref<8x16xf32, #tpu.memory_space<vmem>>, vector<1x16xf32>,
    %c4_i32 = arith.constant 4 : i32
    %34 = arith.addi %0, %c4_i32 : i32
    %c2_i32_18 = arith.constant 2 : i32
    %35 = arith.muli %34, %c2_i32_18 : i32
    %c0_i32_19 = arith.constant 0 : i32
    %36 = arith.addi %35, %c0_i32_19 : i32
    %37 = arith.index_cast %36 : i32 to index
    %38 = memref.load %arg1[%37] : memref<16xi32, #tpu.memory_space<smem>>
    %39 = arith.index_cast %38 : i32 to index
    %c0_20 = arith.constant 0 : index
    %40 = vector.load %arg2[%39, %c0_20] : memref<128x16xf32, #tpu.memory_space<vmem>>, vector<1x16xf32>
    %c4 = arith.constant 4 : index
    %c0_21 = arith.constant 0 : index
    %41 = vector.load %arg8[%c4, %c0_21] : memref<8x16xf32, #tpu.memory_space<vmem>>, vector<1x16xf32>
    tpu.vector_store %arg8[%c4, %c0_21], %40 {strides = array<i32>} : memref<8x16xf32, #tpu.memory_space<vmem>>, vector<1x16xf32>,
    %c5_i32 = arith.constant 5 : i32
    %42 = arith.addi %0, %c5_i32 : i32
    %c2_i32_22 = arith.constant 2 : i32
    %43 = arith.muli %42, %c2_i32_22 : i32
    %c0_i32_23 = arith.constant 0 : i32
    %44 = arith.addi %43, %c0_i32_23 : i32
    %45 = arith.index_cast %44 : i32 to index
    %46 = memref.load %arg1[%45] : memref<16xi32, #tpu.memory_space<smem>>
    %47 = arith.index_cast %46 : i32 to index
    %c0_24 = arith.constant 0 : index
    %48 = vector.load %arg2[%47, %c0_24] : memref<128x16xf32, #tpu.memory_space<vmem>>, vector<1x16xf32>
    %c5 = arith.constant 5 : index
    %c0_25 = arith.constant 0 : index
    %49 = vector.load %arg8[%c5, %c0_25] : memref<8x16xf32, #tpu.memory_space<vmem>>, vector<1x16xf32>
    tpu.vector_store %arg8[%c5, %c0_25], %48 {strides = array<i32>} : memref<8x16xf32, #tpu.memory_space<vmem>>, vector<1x16xf32>,
    %c6_i32 = arith.constant 6 : i32
    %50 = arith.addi %0, %c6_i32 : i32
    %c2_i32_26 = arith.constant 2 : i32
    %51 = arith.muli %50, %c2_i32_26 : i32
    %c0_i32_27 = arith.constant 0 : i32
    %52 = arith.addi %51, %c0_i32_27 : i32
    %53 = arith.index_cast %52 : i32 to index
    %54 = memref.load %arg1[%53] : memref<16xi32, #tpu.memory_space<smem>>
    %55 = arith.index_cast %54 : i32 to index
    %c0_28 = arith.constant 0 : index
    %56 = vector.load %arg2[%55, %c0_28] : memref<128x16xf32, #tpu.memory_space<vmem>>, vector<1x16xf32>
    %c6 = arith.constant 6 : index
    %c0_29 = arith.constant 0 : index
    %57 = vector.load %arg8[%c6, %c0_29] : memref<8x16xf32, #tpu.memory_space<vmem>>, vector<1x16xf32>
    tpu.vector_store %arg8[%c6, %c0_29], %56 {strides = array<i32>} : memref<8x16xf32, #tpu.memory_space<vmem>>, vector<1x16xf32>,
    %c7_i32 = arith.constant 7 : i32
    %58 = arith.addi %0, %c7_i32 : i32
    %c2_i32_30 = arith.constant 2 : i32
    %59 = arith.muli %58, %c2_i32_30 : i32
    %c0_i32_31 = arith.constant 0 : i32
    %60 = arith.addi %59, %c0_i32_31 : i32
    %61 = arith.index_cast %60 : i32 to index
    %62 = memref.load %arg1[%61] : memref<16xi32, #tpu.memory_space<smem>>
    %63 = arith.index_cast %62 : i32 to index
    %c0_32 = arith.constant 0 : index
    %64 = vector.load %arg2[%63, %c0_32] : memref<128x16xf32, #tpu.memory_space<vmem>>, vector<1x16xf32>
    %c7 = arith.constant 7 : index
    %c0_33 = arith.constant 0 : index
    %65 = vector.load %arg8[%c7, %c0_33] : memref<8x16xf32, #tpu.memory_space<vmem>>, vector<1x16xf32>
    tpu.vector_store %arg8[%c7, %c0_33], %64 {strides = array<i32>} : memref<8x16xf32, #tpu.memory_space<vmem>>, vector<1x16xf32>,
    %c0_34 = arith.constant 0 : index
    %c0_35 = arith.constant 0 : index
    %66 = vector.load %arg8[%c0_34, %c0_35] : memref<8x16xf32, #tpu.memory_space<vmem>>, vector<8x16xf32>
    %c0_36 = arith.constant 0 : index
    %c0_37 = arith.constant 0 : index
    %c0_38 = arith.constant 0 : index
    %67 = vector.load %arg3[%c0_36, %c0_37, %c0_38] : memref<2x16x128xf32, #tpu.memory_space<vmem>>, vector<1x16x128xf32>
    %68 = vector.shape_cast %67 : vector<1x16x128xf32> to vector<16x128xf32>
    %cst = arith.constant dense<0.000000e+00> : vector<8x128xf32>
    %69 = tpu.matmul %66, %68, %cst {dimension_numbers = #tpu.dot_dimension_numbers<[1], [0], [0], [1], [0, 0, 1, 1], [], []>} : vector<8x16xf32>, vector<16x128xf32>, vector<8x128xf32> -> vector<8x128xf32>
    %70 = vector.broadcast %1 : vector<1x128xf32> to vector<8x128xf32>
    %71 = arith.addf %70, %69 : vector<8x128xf32>
    %c0_i32_39 = arith.constant 0 : i32
    %72 = arith.addi %0, %c0_i32_39 : i32
    %c2_i32_40 = arith.constant 2 : i32
    %73 = arith.muli %72, %c2_i32_40 : i32
    %c1_i32_41 = arith.constant 1 : i32
    %74 = arith.addi %73, %c1_i32_41 : i32
    %75 = arith.index_cast %74 : i32 to index
    %76 = memref.load %arg1[%75] : memref<16xi32, #tpu.memory_space<smem>>
    %77 = arith.index_cast %76 : i32 to index
    %c0_42 = arith.constant 0 : index
    %78 = vector.load %arg2[%77, %c0_42] : memref<128x16xf32, #tpu.memory_space<vmem>>, vector<1x16xf32>
    %c0_43 = arith.constant 0 : index
    %c0_44 = arith.constant 0 : index
    %79 = vector.load %arg8[%c0_43, %c0_44] : memref<8x16xf32, #tpu.memory_space<vmem>>, vector<1x16xf32>
    tpu.vector_store %arg8[%c0_43, %c0_44], %78 {strides = array<i32>} : memref<8x16xf32, #tpu.memory_space<vmem>>, vector<1x16xf32>,
    %c1_i32_45 = arith.constant 1 : i32
    %80 = arith.addi %0, %c1_i32_45 : i32
    %c2_i32_46 = arith.constant 2 : i32
    %81 = arith.muli %80, %c2_i32_46 : i32
    %c1_i32_47 = arith.constant 1 : i32
    %82 = arith.addi %81, %c1_i32_47 : i32
    %83 = arith.index_cast %82 : i32 to index
    %84 = memref.load %arg1[%83] : memref<16xi32, #tpu.memory_space<smem>>
    %85 = arith.index_cast %84 : i32 to index
    %c0_48 = arith.constant 0 : index
    %86 = vector.load %arg2[%85, %c0_48] : memref<128x16xf32, #tpu.memory_space<vmem>>, vector<1x16xf32>
    %c1_49 = arith.constant 1 : index
    %c0_50 = arith.constant 0 : index
    %87 = vector.load %arg8[%c1_49, %c0_50] : memref<8x16xf32, #tpu.memory_space<vmem>>, vector<1x16xf32>
    tpu.vector_store %arg8[%c1_49, %c0_50], %86 {strides = array<i32>} : memref<8x16xf32, #tpu.memory_space<vmem>>, vector<1x16xf32>,
    %c2_i32_51 = arith.constant 2 : i32
    %88 = arith.addi %0, %c2_i32_51 : i32
    %c2_i32_52 = arith.constant 2 : i32
    %89 = arith.muli %88, %c2_i32_52 : i32
    %c1_i32_53 = arith.constant 1 : i32
    %90 = arith.addi %89, %c1_i32_53 : i32
    %91 = arith.index_cast %90 : i32 to index
    %92 = memref.load %arg1[%91] : memref<16xi32, #tpu.memory_space<smem>>
    %93 = arith.index_cast %92 : i32 to index
    %c0_54 = arith.constant 0 : index
    %94 = vector.load %arg2[%93, %c0_54] : memref<128x16xf32, #tpu.memory_space<vmem>>, vector<1x16xf32>
    %c2_55 = arith.constant 2 : index
    %c0_56 = arith.constant 0 : index
    %95 = vector.load %arg8[%c2_55, %c0_56] : memref<8x16xf32, #tpu.memory_space<vmem>>, vector<1x16xf32>
    tpu.vector_store %arg8[%c2_55, %c0_56], %94 {strides = array<i32>} : memref<8x16xf32, #tpu.memory_space<vmem>>, vector<1x16xf32>,
    %c3_i32_57 = arith.constant 3 : i32
    %96 = arith.addi %0, %c3_i32_57 : i32
    %c2_i32_58 = arith.constant 2 : i32
    %97 = arith.muli %96, %c2_i32_58 : i32
    %c1_i32_59 = arith.constant 1 : i32
    %98 = arith.addi %97, %c1_i32_59 : i32
    %99 = arith.index_cast %98 : i32 to index
    %100 = memref.load %arg1[%99] : memref<16xi32, #tpu.memory_space<smem>>
    %101 = arith.index_cast %100 : i32 to index
    %c0_60 = arith.constant 0 : index
    %102 = vector.load %arg2[%101, %c0_60] : memref<128x16xf32, #tpu.memory_space<vmem>>, vector<1x16xf32>
    %c3_61 = arith.constant 3 : index
    %c0_62 = arith.constant 0 : index
    %103 = vector.load %arg8[%c3_61, %c0_62] : memref<8x16xf32, #tpu.memory_space<vmem>>, vector<1x16xf32>
    tpu.vector_store %arg8[%c3_61, %c0_62], %102 {strides = array<i32>} : memref<8x16xf32, #tpu.memory_space<vmem>>, vector<1x16xf32>,
    %c4_i32_63 = arith.constant 4 : i32
    %104 = arith.addi %0, %c4_i32_63 : i32
    %c2_i32_64 = arith.constant 2 : i32
    %105 = arith.muli %104, %c2_i32_64 : i32
    %c1_i32_65 = arith.constant 1 : i32
    %106 = arith.addi %105, %c1_i32_65 : i32
    %107 = arith.index_cast %106 : i32 to index
    %108 = memref.load %arg1[%107] : memref<16xi32, #tpu.memory_space<smem>>
    %109 = arith.index_cast %108 : i32 to index
    %c0_66 = arith.constant 0 : index
    %110 = vector.load %arg2[%109, %c0_66] : memref<128x16xf32, #tpu.memory_space<vmem>>, vector<1x16xf32>
    %c4_67 = arith.constant 4 : index
    %c0_68 = arith.constant 0 : index
    %111 = vector.load %arg8[%c4_67, %c0_68] : memref<8x16xf32, #tpu.memory_space<vmem>>, vector<1x16xf32>
    tpu.vector_store %arg8[%c4_67, %c0_68], %110 {strides = array<i32>} : memref<8x16xf32, #tpu.memory_space<vmem>>, vector<1x16xf32>,
    %c5_i32_69 = arith.constant 5 : i32
    %112 = arith.addi %0, %c5_i32_69 : i32
    %c2_i32_70 = arith.constant 2 : i32
    %113 = arith.muli %112, %c2_i32_70 : i32
    %c1_i32_71 = arith.constant 1 : i32
    %114 = arith.addi %113, %c1_i32_71 : i32
    %115 = arith.index_cast %114 : i32 to index
    %116 = memref.load %arg1[%115] : memref<16xi32, #tpu.memory_space<smem>>
    %117 = arith.index_cast %116 : i32 to index
    %c0_72 = arith.constant 0 : index
    %118 = vector.load %arg2[%117, %c0_72] : memref<128x16xf32, #tpu.memory_space<vmem>>, vector<1x16xf32>
    %c5_73 = arith.constant 5 : index
    %c0_74 = arith.constant 0 : index
    %119 = vector.load %arg8[%c5_73, %c0_74] : memref<8x16xf32, #tpu.memory_space<vmem>>, vector<1x16xf32>
    tpu.vector_store %arg8[%c5_73, %c0_74], %118 {strides = array<i32>} : memref<8x16xf32, #tpu.memory_space<vmem>>, vector<1x16xf32>,
    %c6_i32_75 = arith.constant 6 : i32
    %120 = arith.addi %0, %c6_i32_75 : i32
    %c2_i32_76 = arith.constant 2 : i32
    %121 = arith.muli %120, %c2_i32_76 : i32
    %c1_i32_77 = arith.constant 1 : i32
    %122 = arith.addi %121, %c1_i32_77 : i32
    %123 = arith.index_cast %122 : i32 to index
    %124 = memref.load %arg1[%123] : memref<16xi32, #tpu.memory_space<smem>>
    %125 = arith.index_cast %124 : i32 to index
    %c0_78 = arith.constant 0 : index
    %126 = vector.load %arg2[%125, %c0_78] : memref<128x16xf32, #tpu.memory_space<vmem>>, vector<1x16xf32>
    %c6_79 = arith.constant 6 : index
    %c0_80 = arith.constant 0 : index
    %127 = vector.load %arg8[%c6_79, %c0_80] : memref<8x16xf32, #tpu.memory_space<vmem>>, vector<1x16xf32>
    tpu.vector_store %arg8[%c6_79, %c0_80], %126 {strides = array<i32>} : memref<8x16xf32, #tpu.memory_space<vmem>>, vector<1x16xf32>,
    %c7_i32_81 = arith.constant 7 : i32
    %128 = arith.addi %0, %c7_i32_81 : i32
    %c2_i32_82 = arith.constant 2 : i32
    %129 = arith.muli %128, %c2_i32_82 : i32
    %c1_i32_83 = arith.constant 1 : i32
    %130 = arith.addi %129, %c1_i32_83 : i32
    %131 = arith.index_cast %130 : i32 to index
    %132 = memref.load %arg1[%131] : memref<16xi32, #tpu.memory_space<smem>>
    %133 = arith.index_cast %132 : i32 to index
    %c0_84 = arith.constant 0 : index
    %134 = vector.load %arg2[%133, %c0_84] : memref<128x16xf32, #tpu.memory_space<vmem>>, vector<1x16xf32>
    %c7_85 = arith.constant 7 : index
    %c0_86 = arith.constant 0 : index
    %135 = vector.load %arg8[%c7_85, %c0_86] : memref<8x16xf32, #tpu.memory_space<vmem>>, vector<1x16xf32>
    tpu.vector_store %arg8[%c7_85, %c0_86], %134 {strides = array<i32>} : memref<8x16xf32, #tpu.memory_space<vmem>>, vector<1x16xf32>,
    %c0_87 = arith.constant 0 : index
    %c0_88 = arith.constant 0 : index
    %136 = vector.load %arg8[%c0_87, %c0_88] : memref<8x16xf32, #tpu.memory_space<vmem>>, vector<8x16xf32>
    %c1_89 = arith.constant 1 : index
    %c0_90 = arith.constant 0 : index
    %c0_91 = arith.constant 0 : index
    %137 = vector.load %arg3[%c1_89, %c0_90, %c0_91] : memref<2x16x128xf32, #tpu.memory_space<vmem>>, vector<1x16x128xf32>
    %138 = vector.shape_cast %137 : vector<1x16x128xf32> to vector<16x128xf32>
    %cst_92 = arith.constant dense<0.000000e+00> : vector<8x128xf32>
    %139 = tpu.matmul %136, %138, %cst_92 {dimension_numbers = #tpu.dot_dimension_numbers<[1], [0], [0], [1], [0, 0, 1, 1], [], []>} : vector<8x16xf32>, vector<16x128xf32>, vector<8x128xf32> -> vector<8x128xf32>
    %140 = arith.addf %71, %139 : vector<8x128xf32>
    %cst_93 = arith.constant 0.000000e+00 : f32
    %141 = vector.broadcast %cst_93 : f32 to vector<8x128xf32>
    %142 = arith.maximumf %140, %141 : vector<8x128xf32>
    %c0_94 = arith.constant 0 : index
    %c0_95 = arith.constant 0 : index
    %143 = vector.load %arg5[%c0_94, %c0_95] : memref<128x128xf32, #tpu.memory_space<vmem>>, vector<128x128xf32>
    %cst_96 = arith.constant dense<0.000000e+00> : vector<8x128xf32>
    %144 = tpu.matmul %142, %143, %cst_96 {dimension_numbers = #tpu.dot_dimension_numbers<[1], [0], [0], [1], [0, 0, 1, 1], [], []>} : vector<8x128xf32>, vector<128x128xf32>, vector<8x128xf32> -> vector<8x128xf32>
    %c0_97 = arith.constant 0 : index
    %c0_98 = arith.constant 0 : index
    %145 = vector.load %arg6[%c0_97, %c0_98] : memref<1x128xf32, #tpu.memory_space<vmem>>, vector<1x128xf32>
    %146 = vector.broadcast %145 : vector<1x128xf32> to vector<8x128xf32>
    %147 = arith.addf %144, %146 : vector<8x128xf32>
    %cst_99 = arith.constant dense<0xFF800000> : vector<8xf32>
    %148 = vector.multi_reduction <maximumf>, %147, %cst_99 [1] : vector<8x128xf32> to vector<8xf32>
    %149 = vector.shape_cast %148 : vector<8xf32> to vector<8x1xf32>
    %150 = vector.broadcast %149 : vector<8x1xf32> to vector<8x128xf32>
    %151 = arith.subf %147, %150 : vector<8x128xf32>
    %152 = math.exp %151 : vector<8x128xf32>
    %cst_100 = arith.constant dense<0.000000e+00> : vector<8xf32>
    %153 = vector.multi_reduction <add>, %152, %cst_100 [1] : vector<8x128xf32> to vector<8xf32>
    %154 = vector.shape_cast %153 : vector<8xf32> to vector<8x1xf32>
    %155 = math.log %154 : vector<8x1xf32>
    %156 = vector.broadcast %155 : vector<8x1xf32> to vector<8x128xf32>
    %157 = arith.subf %151, %156 : vector<8x128xf32>
    %c0_101 = arith.constant 0 : index
    %c0_102 = arith.constant 0 : index
    %158 = vector.load %arg7[%c0_101, %c0_102] : memref<8x128xf32, #tpu.memory_space<vmem>>, vector<8x128xf32>
    tpu.vector_store %arg7[%c0_101, %c0_102], %157 {strides = array<i32>} : memref<8x128xf32, #tpu.memory_space<vmem>>, vector<8x128xf32>,
    return
  }
  func.func @transform_0(%arg0: i32, %arg1: memref<16xi32, #tpu.memory_space<smem>>) -> (i32, i32) {
    %c0_i32 = arith.constant 0 : i32
    %c0_i32_0 = arith.constant 0 : i32
    %c0_i32_1 = arith.constant 0 : i32
    return %c0_i32, %c0_i32_0 : i32, i32
  }
  func.func @transform_1(%arg0: i32, %arg1: memref<16xi32, #tpu.memory_space<smem>>) -> (i32, i32, i32) {
    %c0_i32 = arith.constant 0 : i32
    %c0_i32_0 = arith.constant 0 : i32
    %c0_i32_1 = arith.constant 0 : i32
    %c0_i32_2 = arith.constant 0 : i32
    return %c0_i32, %c0_i32_0, %c0_i32_1 : i32, i32, i32
  }
  func.func @transform_2(%arg0: i32, %arg1: memref<16xi32, #tpu.memory_space<smem>>) -> (i32, i32) {
    %c0_i32 = arith.constant 0 : i32
    %c0_i32_0 = arith.constant 0 : i32
    %c0_i32_1 = arith.constant 0 : i32
    return %c0_i32, %c0_i32_0 : i32, i32
  }
  func.func @transform_3(%arg0: i32, %arg1: memref<16xi32, #tpu.memory_space<smem>>) -> (i32, i32) {
    %c0_i32 = arith.constant 0 : i32
    %c0_i32_0 = arith.constant 0 : i32
    %c0_i32_1 = arith.constant 0 : i32
    return %c0_i32, %c0_i32_0 : i32, i32
  }
  func.func @transform_4(%arg0: i32, %arg1: memref<16xi32, #tpu.memory_space<smem>>) -> (i32, i32) {
    %c0_i32 = arith.constant 0 : i32
    %c0_i32_0 = arith.constant 0 : i32
    %c0_i32_1 = arith.constant 0 : i32
    return %c0_i32, %c0_i32_0 : i32, i32
  }
  func.func @transform_5(%arg0: i32, %arg1: memref<16xi32, #tpu.memory_space<smem>>) -> (i32, i32) {
    %c0_i32 = arith.constant 0 : i32
    %c0_i32_0 = arith.constant 0 : i32
    return %arg0, %c0_i32 : i32, i32
  }
}

</mosaic_0001>

<llo_original>
// kernel: tpu_custom_call.1
$region0: #{tpu_custom_call.1}
  #allocation0 [shape = 'u32[]', space=smem, size = 0x4, offset = 0x4, fixed_abs, tag = 'smem constant byte address 0x4 - core index']
  #allocation1 [shape = 'u32[144,128]{1,0:T(1,128)}', space=vmem, size = 0x12000, scoped, tag = 'internal scratch']
  #allocation2 [shape = 'f32[8,16]{1,0:T(8,128)}', space=vmem, size = 0x1000, scoped, tag = 'scratch operand']
  #allocation3 [shape = 's32[1]{0}', space=sflag, size = 0x4, scoped, tag = 'scoped memory for tpu_custom_call.1']
  #allocation4 [shape = 'u8[512]{0}', space=smem, size = 0x200, scoped, tag = 'prefetched SMEM operand 0']
  %s0 = inlined_call_operand.vmem [shape: s32[16], index: 0, kind: input, shape index: {}]
  %s1 = inlined_call_operand.vmem [shape: f32[128,16], index: 1, kind: input, shape index: {}]
  %s2 = inlined_call_operand.hbm [shape: f32[2,16,128], index: 2, kind: input, shape index: {}]
  %s3 = inlined_call_operand.vmem [shape: f32[1,128], index: 3, kind: input, shape index: {}]
  %s4 = inlined_call_operand.vmem [shape: f32[128,128], index: 4, kind: input, shape index: {}]
  %s5 = inlined_call_operand.vmem [shape: f32[1,128], index: 5, kind: input, shape index: {}]
  %s6 = inlined_call_operand.hbm [shape: f32[8,128], index: 6, kind: output, shape index: {}]
  %s7 = sld [smem:[#allocation0]]
  $region34: #{tpu_custom_call.1} parent=0
    _
  %s9 = ssub.s32 1, %s7
  %s10 = scalar_select 0, %s9, %s7
  %s11 = sshll.u32 %s0, 4
  %s12 = int_to_ptr.vmem [resolvable:$true] %s11
  %14 = dma.vmem_to_smem %s12, 16, [#allocation4], [#allocation3]
  %15 = dma.done [#allocation3], 16
  %16 = sfence
  $region1: #{tpu_custom_call.1} parent=0
    #allocation5 [shape = 'u8[16384]{0}', space=vmem, size = 0x4000, scoped, tag = 'input window, operand 2, single buffered']
    #allocation6 [shape = 's32[1]{0}', space=sflag, size = 0x4, scoped, tag = 'scoped memory for tpu_custom_call.1']
    #allocation7 [shape = 's32[1]{0}', space=sflag, size = 0x4, scoped, tag = 'scoped memory for tpu_custom_call.1']
    #allocation8 [shape = 'u8[4096]{0}', space=vmem, size = 0x1000, scoped, tag = 'output window, operand 0, single buffered']
    %17 = vsyncpa [#allocation6], 0
    %18 = vsyncpa [#allocation7], 0
    // Predicated region
    $region2: #{tpu_custom_call.1} parent=1 // pred_check
      _
    $region3: #{tpu_custom_call.1} parent=1 // pred_check_branch
      %20 = sbr.rel (0) target = $region5
    $region4: #{tpu_custom_call.1} parent=1 // pred_region
      _
    $region5: #{tpu_custom_call.1} parent=1 // pred_fallthru
      _
    // Predicated region
    $region6: #{tpu_custom_call.1} parent=1 // pred_check
      _
    $region7: #{tpu_custom_call.1} parent=1 // pred_check_branch
      %22 = sbr.rel (0) target = $region9
    $region8: #{tpu_custom_call.1} parent=1 // pred_region
      %s24 = ssub.s32 512, 512
      %25 = vsyncadd [#allocation6], %s24
      %s26 = sshll.u32 [#allocation5], 4
      %s27 = int_to_ptr.vmem [resolvable:$true] %s26
      %32 = dma.hbm_to_vmem [thread:$0]  %s2, 512, %s27, [#allocation6], 128, 128, 8
    $region9: #{tpu_custom_call.1} parent=1 // pred_fallthru
      _
    // Predicated region
    $region10: #{tpu_custom_call.1} parent=1 // pred_check
      _
    $region11: #{tpu_custom_call.1} parent=1 // pred_check_branch
      %34 = sbr.rel (0) target = $region13
    $region12: #{tpu_custom_call.1} parent=1 // pred_region
      _
    $region13: #{tpu_custom_call.1} parent=1 // pred_fallthru
      _
    // Predicated region
    $region14: #{tpu_custom_call.1} parent=1 // pred_check
      _
    $region15: #{tpu_custom_call.1} parent=1 // pred_check_branch
      %36 = sbr.rel (0) target = $region17
    $region16: #{tpu_custom_call.1} parent=1 // pred_region
      _
    $region17: #{tpu_custom_call.1} parent=1 // pred_fallthru
      _
    // Predicated region
    $region18: #{tpu_custom_call.1} parent=1 // pred_check
      _
    $region19: #{tpu_custom_call.1} parent=1 // pred_check_branch
      %38 = sbr.rel (0) target = $region21
    $region20: #{tpu_custom_call.1} parent=1 // pred_region
      _
    $region21: #{tpu_custom_call.1} parent=1 // pred_fallthru
      _
    // Predicated region
    $region22: #{tpu_custom_call.1} parent=1 // pred_check
      _
    $region23: #{tpu_custom_call.1} parent=1 // pred_check_branch
      %40 = sbr.rel (0) target = $region25
    $region24: #{tpu_custom_call.1} parent=1 // pred_region
      %41 = dma.done [#allocation6], 512
    $region25: #{tpu_custom_call.1} parent=1 // pred_fallthru
      _
    %s42 = smul.u32 0, 8
    %v43 = vld [vmem:[%s3] sm:$0x1]
    %s44 = smul.u32 0, 16
    %s45 = sld [smem:[#allocation4 + %s44]]
    %s46 = scalar_lea.vmem %s1, %s45
    %v47 = vld [vmem:[%s46] sm:$0x1]
    %vm48 = vcmask 122880
    %49 = vst.msk [vmem:[#allocation2] sm:$0x1] %vm48, %v47
    %s50 = sadd.s32 %s42, 1
    %s51 = smul.u32 %s50, 2
    %s52 = sld [smem:[#allocation4 + %s51]]
    %s53 = scalar_lea.vmem %s1, %s52
    %v54 = vld [vmem:[%s53] sm:$0x1]
    %55 = vst.msk [vmem:[#allocation2 + $0x1] sm:$0x1] %vm48, %v54
    %s56 = sadd.s32 %s42, 2
    %s57 = smul.u32 %s56, 2
    %s58 = sld [smem:[#allocation4 + %s57]]
    %s59 = scalar_lea.vmem %s1, %s58
    %v60 = vld [vmem:[%s59] sm:$0x1]
    %61 = vst.msk [vmem:[#allocation2 + $0x2] sm:$0x1] %vm48, %v60
    %s62 = sadd.s32 %s42, 3
    %s63 = smul.u32 %s62, 2
    %s64 = sld [smem:[#allocation4 + %s63]]
    %s65 = scalar_lea.vmem %s1, %s64
    %v66 = vld [vmem:[%s65] sm:$0x1]
    %67 = vst.msk [vmem:[#allocation2 + $0x3] sm:$0x1] %vm48, %v66
    %s68 = sadd.s32 %s42, 4
    %s69 = smul.u32 %s68, 2
    %s70 = sld [smem:[#allocation4 + %s69]]
    %s71 = scalar_lea.vmem %s1, %s70
    %v72 = vld [vmem:[%s71] sm:$0x1]
    %73 = vst.msk [vmem:[#allocation2 + $0x4] sm:$0x1] %vm48, %v72
    %s74 = sadd.s32 %s42, 5
    %s75 = smul.u32 %s74, 2
    %s76 = sld [smem:[#allocation4 + %s75]]
    %s77 = scalar_lea.vmem %s1, %s76
    %v78 = vld [vmem:[%s77] sm:$0x1]
    %79 = vst.msk [vmem:[#allocation2 + $0x5] sm:$0x1] %vm48, %v78
    %s80 = sadd.s32 %s42, 6
    %s81 = smul.u32 %s80, 2
    %s82 = sld [smem:[#allocation4 + %s81]]
    %s83 = scalar_lea.vmem %s1, %s82
    %v84 = vld [vmem:[%s83] sm:$0x1]
    %85 = vst.msk [vmem:[#allocation2 + $0x6] sm:$0x1] %vm48, %v84
    %s86 = sadd.s32 %s42, 7
    %s87 = smul.u32 %s86, 2
    %s88 = sld [smem:[#allocation4 + %s87]]
    %s89 = scalar_lea.vmem %s1, %s88
    %v90 = vld [vmem:[%s89] sm:$0x1]
    %91 = vst.msk [vmem:[#allocation2 + $0x7] sm:$0x1] %vm48, %v90
    %v92 = vld [vmem:[#allocation2] sm:$0xff]
    %v93 = vld [vmem:[#allocation5] sm:$0xff]
    %v94 = vld [vmem:[#allocation5 + $0x8] sm:$0xff]
    %vm95 = vcmask 130048
    %v97 = vsel %vm95, %v92, 0
    %99 = vmatprep.subr.mxu0 0.0
    %100 = vmatpush1.msra.mxu0 %v93
    %101 = vmatprep.subr.mxu0 0.0
    %102 = vmatpush1.msra.mxu0 %v94
    %103 = vmatprep.subr.mxu0 0.0
    %104 = vmatpush1.msra.mxu0 0.0
    %105 = vmatprep.subr.mxu0 0.0
    %106 = vmatpush1.msra.mxu0 0.0
    %107 = vmatprep.subr.mxu0 0.0
    %108 = vmatpush1.msra.mxu0 0.0
    %109 = vmatprep.subr.mxu0 0.0
    %110 = vmatpush1.msra.mxu0 0.0
    %111 = vmatprep.subr.mxu0 0.0
    %112 = vmatpush1.msra.mxu0 0.0
    %113 = vmatprep.subr.mxu0 0.0
    %114 = vmatpush1.msra.mxu0 0.0
    %115 = vmatprep.subr.mxu0 0.0
    %116 = vmatpush1.msra.mxu0 0.0
    %117 = vmatprep.subr.mxu0 0.0
    %118 = vmatpush1.msra.mxu0 0.0
    %119 = vmatprep.subr.mxu0 0.0
    %120 = vmatpush1.msra.mxu0 0.0
    %121 = vmatprep.subr.mxu0 0.0
    %122 = vmatpush1.msra.mxu0 0.0
    %123 = vmatprep.subr.mxu0 0.0
    %124 = vmatpush1.msra.mxu0 0.0
    %125 = vmatprep.subr.mxu0 0.0
    %126 = vmatpush1.msra.mxu0 0.0
    %127 = vmatprep.subr.mxu0 0.0
    %128 = vmatpush1.msra.mxu0 0.0
    %129 = vmatprep.subr.mxu0 0.0
    %130 = vmatpush1.msra.mxu0 0.0
    %131 = vmatprep.subr.mxu0 0.0
    %132 = vmatpush1.msra.mxu0 0.0
    %133 = vmatprep.subr.mxu0 0.0
    %134 = vmatpush1.msra.mxu0 0.0
    %135 = vmatprep.subr.mxu0 0.0
    %136 = vmatpush1.msra.mxu0 0.0
    %137 = vmatprep.subr.mxu0 0.0
    %138 = vmatpush1.msra.mxu0 0.0
    %139 = vmatprep.subr.mxu0 0.0
    %140 = vmatpush1.msra.mxu0 0.0
    %141 = vmatprep.subr.mxu0 0.0
    %142 = vmatpush1.msra.mxu0 0.0
    %143 = vmatprep.subr.mxu0 0.0
    %144 = vmatpush1.msra.mxu0 0.0
    %145 = vmatprep.subr.mxu0 0.0
    %146 = vmatpush1.msra.mxu0 0.0
    %147 = vmatprep.subr.mxu0 0.0
    %148 = vmatpush1.msra.mxu0 0.0
    %149 = vmatprep.subr.mxu0 0.0
    %150 = vmatpush1.msra.mxu0 0.0
    %151 = vmatprep.subr.mxu0 0.0
    %152 = vmatpush1.msra.mxu0 0.0
    %153 = vmatprep.subr.mxu0 0.0
    %154 = vmatpush1.msra.mxu0 0.0
    %155 = vmatprep.subr.mxu0 0.0
    %156 = vmatpush1.msra.mxu0 0.0
    %157 = vmatprep.subr.mxu0 0.0
    %158 = vmatpush1.msra.mxu0 0.0
    %159 = vmatprep.subr.mxu0 0.0
    %160 = vmatpush1.msra.mxu0 0.0
    %161 = vmatprep.subr.mxu0 0.0
    %162 = vmatpush1.msra.mxu0 0.0
    %163 = vmatprep.mubr.f32.mxu0 0.0
    %164 = vmatmul.mubr.f32.gmra.mrb[0].mxu0 %v97
    %v165 = vpop.f32.mrb[0].mxu0
    %v166 = vadd.f32 0.0, %v165
    %v167 = vpop.f32.mrb[0].mxu0
    %168 = vdwg.mxu0
    %v170 = vlaneseq
    %v171 = vshrl.u32 %v170, 7
    %v172 = vsub.s32 0, %v171
    %v173 = vrot.slane %v43, %v172
    %v175 = vadd.f32 %v173, %v166
    %s176 = sadd.s32 %s44, 1
    %s177 = sld [smem:[#allocation4 + %s176]]
    %s178 = scalar_lea.vmem %s1, %s177
    %v179 = vld [vmem:[%s178] sm:$0x1]
    %180 = vst.msk [vmem:[#allocation2] sm:$0x1] %vm48, %v179
    %s181 = sadd.s32 %s51, 1
    %s182 = sld [smem:[#allocation4 + %s181]]
    %s183 = scalar_lea.vmem %s1, %s182
    %v184 = vld [vmem:[%s183] sm:$0x1]
    %185 = vst.msk [vmem:[#allocation2 + $0x1] sm:$0x1] %vm48, %v184
    %s186 = sadd.s32 %s57, 1
    %s187 = sld [smem:[#allocation4 + %s186]]
    %s188 = scalar_lea.vmem %s1, %s187
    %v189 = vld [vmem:[%s188] sm:$0x1]
    %190 = vst.msk [vmem:[#allocation2 + $0x2] sm:$0x1] %vm48, %v189
    %s191 = sadd.s32 %s63, 1
    %s192 = sld [smem:[#allocation4 + %s191]]
    %s193 = scalar_lea.vmem %s1, %s192
    %v194 = vld [vmem:[%s193] sm:$0x1]
    %195 = vst.msk [vmem:[#allocation2 + $0x3] sm:$0x1] %vm48, %v194
    %s196 = sadd.s32 %s69, 1
    %s197 = sld [smem:[#allocation4 + %s196]]
    %s198 = scalar_lea.vmem %s1, %s197
    %v199 = vld [vmem:[%s198] sm:$0x1]
    %200 = vst.msk [vmem:[#allocation2 + $0x4] sm:$0x1] %vm48, %v199
    %s201 = sadd.s32 %s75, 1
    %s202 = sld [smem:[#allocation4 + %s201]]
    %s203 = scalar_lea.vmem %s1, %s202
    %v204 = vld [vmem:[%s203] sm:$0x1]
    %205 = vst.msk [vmem:[#allocation2 + $0x5] sm:$0x1] %vm48, %v204
    %s206 = sadd.s32 %s81, 1
    %s207 = sld [smem:[#allocation4 + %s206]]
    %s208 = scalar_lea.vmem %s1, %s207
    %v209 = vld [vmem:[%s208] sm:$0x1]
    %210 = vst.msk [vmem:[#allocation2 + $0x6] sm:$0x1] %vm48, %v209
    %s211 = sadd.s32 %s87, 1
    %s212 = sld [smem:[#allocation4 + %s211]]
    %s213 = scalar_lea.vmem %s1, %s212
    %v214 = vld [vmem:[%s213] sm:$0x1]
    %215 = vst.msk [vmem:[#allocation2 + $0x7] sm:$0x1] %vm48, %v214
    %v216 = vld [vmem:[#allocation2] sm:$0xff]
    %s217 = scalar_lea.vmem [#allocation5], 16
    %v218 = vld [vmem:[%s217] sm:$0xff]
    %v219 = vld [vmem:[%s217 + $0x8] sm:$0xff]
    %v221 = vsel %vm95, %v216, 0
    %223 = vmatprep.subr.mxu0 0.0
    %224 = vmatpush1.msra.mxu0 %v218
    %225 = vmatprep.subr.mxu0 0.0
    %226 = vmatpush1.msra.mxu0 %v219
    %227 = vmatprep.subr.mxu0 0.0
    %228 = vmatpush1.msra.mxu0 0.0
    %229 = vmatprep.subr.mxu0 0.0
    %230 = vmatpush1.msra.mxu0 0.0
    %231 = vmatprep.subr.mxu0 0.0
    %232 = vmatpush1.msra.mxu0 0.0
    %233 = vmatprep.subr.mxu0 0.0
    %234 = vmatpush1.msra.mxu0 0.0
    %235 = vmatprep.subr.mxu0 0.0
    %236 = vmatpush1.msra.mxu0 0.0
    %237 = vmatprep.subr.mxu0 0.0
    %238 = vmatpush1.msra.mxu0 0.0
    %239 = vmatprep.subr.mxu0 0.0
    %240 = vmatpush1.msra.mxu0 0.0
    %241 = vmatprep.subr.mxu0 0.0
    %242 = vmatpush1.msra.mxu0 0.0
    %243 = vmatprep.subr.mxu0 0.0
    %244 = vmatpush1.msra.mxu0 0.0
    %245 = vmatprep.subr.mxu0 0.0
    %246 = vmatpush1.msra.mxu0 0.0
    %247 = vmatprep.subr.mxu0 0.0
    %248 = vmatpush1.msra.mxu0 0.0
    %249 = vmatprep.subr.mxu0 0.0
    %250 = vmatpush1.msra.mxu0 0.0
    %251 = vmatprep.subr.mxu0 0.0
    %252 = vmatpush1.msra.mxu0 0.0
    %253 = vmatprep.subr.mxu0 0.0
    %254 = vmatpush1.msra.mxu0 0.0
    %255 = vmatprep.subr.mxu0 0.0
    %256 = vmatpush1.msra.mxu0 0.0
    %257 = vmatprep.subr.mxu0 0.0
    %258 = vmatpush1.msra.mxu0 0.0
    %259 = vmatprep.subr.mxu0 0.0
    %260 = vmatpush1.msra.mxu0 0.0
    %261 = vmatprep.subr.mxu0 0.0
    %262 = vmatpush1.msra.mxu0 0.0
    %263 = vmatprep.subr.mxu0 0.0
    %264 = vmatpush1.msra.mxu0 0.0
    %265 = vmatprep.subr.mxu0 0.0
    %266 = vmatpush1.msra.mxu0 0.0
    %267 = vmatprep.subr.mxu0 0.0
    %268 = vmatpush1.msra.mxu0 0.0
    %269 = vmatprep.subr.mxu0 0.0
    %270 = vmatpush1.msra.mxu0 0.0
    %271 = vmatprep.subr.mxu0 0.0
    %272 = vmatpush1.msra.mxu0 0.0
    %273 = vmatprep.subr.mxu0 0.0
    %274 = vmatpush1.msra.mxu0 0.0
    %275 = vmatprep.subr.mxu0 0.0
    %276 = vmatpush1.msra.mxu0 0.0
    %277 = vmatprep.subr.mxu0 0.0
    %278 = vmatpush1.msra.mxu0 0.0
    %279 = vmatprep.subr.mxu0 0.0
    %280 = vmatpush1.msra.mxu0 0.0
    %281 = vmatprep.subr.mxu0 0.0
    %282 = vmatpush1.msra.mxu0 0.0
    %283 = vmatprep.subr.mxu0 0.0
    %284 = vmatpush1.msra.mxu0 0.0
    %285 = vmatprep.subr.mxu0 0.0
    %286 = vmatpush1.msra.mxu0 0.0
    %287 = vmatprep.mubr.f32.mxu0 0.0
    %288 = vmatmul.mubr.f32.gmra.mrb[0].mxu0 %v221
    %v289 = vpop.f32.mrb[0].mxu0
    %v290 = vadd.f32 0.0, %v289
    %v291 = vpop.f32.mrb[0].mxu0
    %292 = vdwg.mxu0
    %v293 = vadd.f32 %v175, %v290
    %v294 = vmax.f32 %v293, 0.0
    %v295 = vld [vmem:[%s4] sm:$0xff]
    %v296 = vld [vmem:[%s4 + $0x8] sm:$0xff]
    %v297 = vld [vmem:[%s4 + $0x10] sm:$0xff]
    %v298 = vld [vmem:[%s4 + $0x18] sm:$0xff]
    %v299 = vld [vmem:[%s4 + $0x20] sm:$0xff]
    %v300 = vld [vmem:[%s4 + $0x28] sm:$0xff]
    %v301 = vld [vmem:[%s4 + $0x30] sm:$0xff]
    %v302 = vld [vmem:[%s4 + $0x38] sm:$0xff]
    %v303 = vld [vmem:[%s4 + $0x40] sm:$0xff]
    %v304 = vld [vmem:[%s4 + $0x48] sm:$0xff]
    %v305 = vld [vmem:[%s4 + $0x50] sm:$0xff]
    %v306 = vld [vmem:[%s4 + $0x58] sm:$0xff]
    %v307 = vld [vmem:[%s4 + $0x60] sm:$0xff]
    %v308 = vld [vmem:[%s4 + $0x68] sm:$0xff]
    %v309 = vld [vmem:[%s4 + $0x70] sm:$0xff]
    %v310 = vld [vmem:[%s4 + $0x78] sm:$0xff]
    %v311 = vld [vmem:[%s5] sm:$0x1]
    %v313 = vlaneseq
    %v314 = vshrl.u32 %v313, 7
    %v315 = vsub.s32 0, %v314
    %v316 = vrot.slane %v311, %v315
    %318 = vmatprep.subr.mxu0 0.0
    %319 = vmatpush1.msra.mxu0 %v295
    %320 = vmatprep.subr.mxu0 0.0
    %321 = vmatpush1.msra.mxu0 %v296
    %322 = vmatprep.subr.mxu0 0.0
    %323 = vmatpush1.msra.mxu0 %v297
    %324 = vmatprep.subr.mxu0 0.0
    %325 = vmatpush1.msra.mxu0 %v298
    %326 = vmatprep.subr.mxu0 0.0
    %327 = vmatpush1.msra.mxu0 %v299
    %328 = vmatprep.subr.mxu0 0.0
    %329 = vmatpush1.msra.mxu0 %v300
    %330 = vmatprep.subr.mxu0 0.0
    %331 = vmatpush1.msra.mxu0 %v301
    %332 = vmatprep.subr.mxu0 0.0
    %333 = vmatpush1.msra.mxu0 %v302
    %334 = vmatprep.subr.mxu0 0.0
    %335 = vmatpush1.msra.mxu0 %v303
    %336 = vmatprep.subr.mxu0 0.0
    %337 = vmatpush1.msra.mxu0 %v304
    %338 = vmatprep.subr.mxu0 0.0
    %339 = vmatpush1.msra.mxu0 %v305
    %340 = vmatprep.subr.mxu0 0.0
    %341 = vmatpush1.msra.mxu0 %v306
    %342 = vmatprep.subr.mxu0 0.0
    %343 = vmatpush1.msra.mxu0 %v307
    %344 = vmatprep.subr.mxu0 0.0
    %345 = vmatpush1.msra.mxu0 %v308
    %346 = vmatprep.subr.mxu0 0.0
    %347 = vmatpush1.msra.mxu0 %v309
    %348 = vmatprep.subr.mxu0 0.0
    %349 = vmatpush1.msra.mxu0 %v310
    %350 = vmatprep.subr.mxu0 0.0
    %351 = vmatpush1.msra.mxu0 0.0
    %352 = vmatprep.subr.mxu0 0.0
    %353 = vmatpush1.msra.mxu0 0.0
    %354 = vmatprep.subr.mxu0 0.0
    %355 = vmatpush1.msra.mxu0 0.0
    %356 = vmatprep.subr.mxu0 0.0
    %357 = vmatpush1.msra.mxu0 0.0
    %358 = vmatprep.subr.mxu0 0.0
    %359 = vmatpush1.msra.mxu0 0.0
    %360 = vmatprep.subr.mxu0 0.0
    %361 = vmatpush1.msra.mxu0 0.0
    %362 = vmatprep.subr.mxu0 0.0
    %363 = vmatpush1.msra.mxu0 0.0
    %364 = vmatprep.subr.mxu0 0.0
    %365 = vmatpush1.msra.mxu0 0.0
    %366 = vmatprep.subr.mxu0 0.0
    %367 = vmatpush1.msra.mxu0 0.0
    %368 = vmatprep.subr.mxu0 0.0
    %369 = vmatpush1.msra.mxu0 0.0
    %370 = vmatprep.subr.mxu0 0.0
    %371 = vmatpush1.msra.mxu0 0.0
    %372 = vmatprep.subr.mxu0 0.0
    %373 = vmatpush1.msra.mxu0 0.0
    %374 = vmatprep.subr.mxu0 0.0
    %375 = vmatpush1.msra.mxu0 0.0
    %376 = vmatprep.subr.mxu0 0.0
    %377 = vmatpush1.msra.mxu0 0.0
    %378 = vmatprep.subr.mxu0 0.0
    %379 = vmatpush1.msra.mxu0 0.0
    %380 = vmatprep.subr.mxu0 0.0
    %381 = vmatpush1.msra.mxu0 0.0
    %382 = vmatprep.mubr.f32.mxu0 0.0
    %383 = vmatmul.mubr.f32.gmra.mrb[0].mxu0 %v294
    %v384 = vpop.f32.mrb[0].mxu0
    %v385 = vadd.f32 %v316, %v384
    %v386 = vpop.f32.mrb[0].mxu0
    %387 = vdwg.mxu0
    %388 = vmax.xlane.f32.xlu0 %v385
    %v389 = vpop.xlane.xlu0 %388
    %v390 = vsub.f32 %v385, %v389
    %v391 = vmul.f32 %v390, 1.442695
    %v392 = vpow.pop %v391
    %393 = vadd.xlane.f32.xlu0 %v392
    %v394 = vpop.xlane.xlu0 %393
    %v395 = vlog2.pop %v394
    %v396 = vmul.f32 %v395, 0.6931472
    %v397 = vsub.f32 %v390, %v396
    %398 = vst [vmem:[#allocation8] sm:$0xff] %v397
    // Predicated region
    $region26: #{tpu_custom_call.1} parent=1 // pred_check
      _
    $region27: #{tpu_custom_call.1} parent=1 // pred_check_branch
      %400 = sbr.rel (0) target = $region29
    $region28: #{tpu_custom_call.1} parent=1 // pred_region
      %s402 = ssub.s32 128, 128
      %403 = vsyncadd [#allocation7], %s402
      %s405 = sshll.u32 [#allocation8], 4
      %s406 = int_to_ptr.vmem [resolvable:$true] %s405
      %408 = dma.vmem_to_hbm [thread:$0]  %s406, 128, %s6, [#allocation7]
    $region29: #{tpu_custom_call.1} parent=1 // pred_fallthru
      _
    // Predicated region
    $region30: #{tpu_custom_call.1} parent=1 // pred_check
      _
    $region31: #{tpu_custom_call.1} parent=1 // pred_check_branch
      %410 = sbr.rel (0) target = $region33
    $region32: #{tpu_custom_call.1} parent=1 // pred_region
      %411 = dma.done [#allocation7], 128
    $region33: #{tpu_custom_call.1} parent=1 // pred_fallthru
      _
    %412 = vsyncpa [#allocation6], 1
    %413 = vsyncpa [#allocation7], 1

</llo_original>
